<compile_context>
chip_gen: v7x
topology: tpu7x:2x2x1
jax: 0.10.0
libtpu: 0.0.40
codegen_flags: <defaults>
</compile_context>

<pallas_src>
import math
import functools

import jax
import jax.numpy as jnp
import numpy as np
from jax.experimental import pallas as pl
from jax.experimental.pallas import tpu as pltpu


def _gelu_exact(x):
    # PyTorch nn.GELU() default = exact (erf-based) GELU.
    return 0.5 * x * (1.0 + jax.lax.erf(x * (1.0 / math.sqrt(2.0))))


def _vmem_budget_bytes():
    """Generation-aware VMEM budget (~75% of per-core VMEM).

    v5e/v6e have 128 MiB, v7x has 64 MiB per TensorCore; if the query is
    unavailable we conservatively assume the v7x figure.
    """
    phys = 64 * 1024 * 1024
    try:
        phys = int(pltpu.get_tpu_info().vmem_capacity_bytes)
    except Exception:
        pass
    return max(32 * 1024 * 1024, min((phys * 3) // 4, 100 * 1024 * 1024))


# ----------------------------------------------------------------------------
# Fused single-pass kernel: whole per-batch slab resident in VMEM.
#   grid = (B,), block = (1, C, S).  Reads x once, writes out once.
# ----------------------------------------------------------------------------
def _fused_kernel(x_ref, w1t_ref, b1_ref, w2t_ref, b2_ref, o_ref, *, inv_s):
    x = x_ref[0].astype(jnp.float32)                         # (C, S), f32 math
    avg = jnp.sum(x, axis=1, keepdims=True) * inv_s          # (C, 1)
    mx = jnp.max(x, axis=1, keepdims=True)                   # (C, 1)
    c = avg.shape[0]
    # Stack [avg | max] into (C, 2) -> single fused FC for both branches.
    col = jax.lax.broadcasted_iota(jnp.int32, (c, 2), 1)
    v = jnp.where(col == 0, avg, mx)                         # (C, 2)
    h = jnp.dot(w1t_ref[...], v, preferred_element_type=jnp.float32) + b1_ref[...]
    h = _gelu_exact(h)                                       # (Ch, 2)
    o = jnp.dot(w2t_ref[...], h, preferred_element_type=jnp.float32) + b2_ref[...]
    gate = jnp.sum(jax.nn.sigmoid(o), axis=1, keepdims=True)  # (C, 1)
    o_ref[0] = (x * gate).astype(o_ref.dtype)                 # broadcast along lanes


# ----------------------------------------------------------------------------
# Streaming fallback pass 1: per-channel sum/max stats over S tiles.
#   (C, 128) VPU accumulators; one cross-lane reduce in the epilogue.
#   Output: (B, C, 2) with column 0 = mean, column 1 = max.
# ----------------------------------------------------------------------------
def _stats_kernel(x_ref, stats_ref, sum_ref, max_ref, *, inv_s, n_chunks):
    s_idx = pl.program_id(1)

    @pl.when(s_idx == 0)
    def _():
        sum_ref[...] = jnp.zeros_like(sum_ref)
        max_ref[...] = jnp.full_like(max_ref, -jnp.inf)

    # Static 128-aligned lane slices -> pure vld + VPU inner loop (no per-step XLU).
    s_acc = sum_ref[...]
    m_acc = max_ref[...]
    for k in range(n_chunks):
        blk = x_ref[0, :, k * 128:(k + 1) * 128].astype(jnp.float32)   # (C, 128)
        s_acc = s_acc + blk
        m_acc = jnp.maximum(m_acc, blk)
    sum_ref[...] = s_acc
    max_ref[...] = m_acc

    @pl.when(s_idx == pl.num_programs(1) - 1)
    def _():
        avg = jnp.sum(sum_ref[...], axis=1, keepdims=True) * inv_s     # (C, 1)
        mx = jnp.max(max_ref[...], axis=1, keepdims=True)              # (C, 1)
        c = avg.shape[0]
        col = jax.lax.broadcasted_iota(jnp.int32, (c, 2), 1)
        stats_ref[0] = jnp.where(col == 0, avg, mx)                    # (C, 2)


def _pick_s_tile(s, c, budget_bytes, max_chunks=256):
    """Largest multiple-of-128 tile dividing s, bounded by a byte budget and by
    max_chunks (keeps the statically-unrolled chunk loop a reasonable size)."""
    assert s % 128 == 0
    max_ts_budget = max(128, (budget_bytes // (4 * max(c, 1))) // 128 * 128)
    ts = min(s, max_ts_budget, max_chunks * 128)
    while s % ts != 0:
        ts -= 128
    return ts


def channel_attention_3d(x, w1, b1, w2, b2, *, force_path=None, s_tile=None):
    """x: (b, c, d, h, w) (NCDHW, like the PyTorch module).

    w1: (C, Ch), b1: (1, Ch), w2: (Ch, C), b2: (1, C)  (so that v @ w1 etc.)
    force_path: None (auto), "fused", or "stream" (testing hook).
    """
    b, c, d, h, w = x.shape
    s = d * h * w
    ch = w1.shape[1]

    # Free reshape: keeps NCDHW memory layout, no transpose / data movement.
    x3 = x.reshape(b, c, s)

    # Channels on the sublane axis inside the kernels.
    w1t = jnp.transpose(w1)        # (Ch, C)
    w2t = jnp.transpose(w2)        # (C, Ch)
    b1c = b1.reshape(ch, 1)
    b2c = b2.reshape(c, 1)

    inv_s = 1.0 / float(s)
    vmem_limit = _vmem_budget_bytes()

    # Fused-path sizing: 2x in + 2x out double-buffered slabs + one f32 working
    # slab + small weights/headroom must fit; also cap the slab so the single-block
    # codegen stays compact (larger cap on v5e/v6e's 128 MiB VMEM).
    slab_bytes = c * s * jnp.dtype(x.dtype).itemsize
    slab_f32 = c * s * 4
    fused_need = 4 * slab_bytes + slab_f32 + (2 << 20)
    fused_slab_cap = (16 << 20) if vmem_limit >= (80 << 20) else (8 << 20)
    fits_fused = (fused_need <= vmem_limit) and (slab_f32 <= fused_slab_cap)

    use_fused = (force_path == "fused") or (
        force_path is None and (fits_fused or s % 128 != 0))

    if use_fused:
        # TODO(synk): for B < num TensorCores on v7x, add a parallel core-split of
        # the S axis (partial stats combined in an epilogue) so the second core
        # does not idle; currently only the batch axis is parallel.
        out3 = pl.pallas_call(
            functools.partial(_fused_kernel, inv_s=inv_s),
            out_shape=jax.ShapeDtypeStruct((b, c, s), x.dtype),
            grid_spec=pltpu.PrefetchScalarGridSpec(
                num_scalar_prefetch=0,
                grid=(b,),
                in_specs=[
                    pl.BlockSpec((1, c, s), lambda i: (i, 0, 0)),   # whole slab
                    pl.BlockSpec((ch, c), lambda i: (0, 0)),        # W1^T
                    pl.BlockSpec((ch, 1), lambda i: (0, 0)),        # b1
                    pl.BlockSpec((c, ch), lambda i: (0, 0)),        # W2^T
                    pl.BlockSpec((c, 1), lambda i: (0, 0)),         # b2
                ],
                out_specs=pl.BlockSpec((1, c, s), lambda i: (i, 0, 0)),
            ),
            compiler_params=pltpu.CompilerParams(
                dimension_semantics=("parallel",),
                vmem_limit_bytes=vmem_limit,
            ),
        )(x3, w1t, b1c, w2t, b2c)
        return out3.reshape(b, c, d, h, w)

    # ---------------- Streaming fallback (slab too large for VMEM) ----------------
    assert s % 128 == 0, "streaming path requires S to be a multiple of 128"
    if s_tile is None:
        s_tile = _pick_s_tile(s, c, budget_bytes=max(4 << 20, vmem_limit // 4))
    assert s % s_tile == 0 and s_tile % 128 == 0
    n_s = s // s_tile

    stats = pl.pallas_call(
        functools.partial(_stats_kernel, inv_s=inv_s, n_chunks=s_tile // 128),
        out_shape=jax.ShapeDtypeStruct((b, c, 2), jnp.float32),
        grid_spec=pltpu.PrefetchScalarGridSpec(
            num_scalar_prefetch=0,
            grid=(b, n_s),
            in_specs=[pl.BlockSpec((1, c, s_tile), lambda i, j: (i, 0, j))],
            out_specs=pl.BlockSpec((1, c, 2), lambda i, j: (i, 0, 0)),
            scratch_shapes=[
                pltpu.VMEM((c, 128), jnp.float32),   # running per-lane sum
                pltpu.VMEM((c, 128), jnp.float32),   # running per-lane max
            ],
        ),
        compiler_params=pltpu.CompilerParams(
            dimension_semantics=("parallel", "arbitrary"),
            vmem_limit_bytes=vmem_limit,
        ),
    )(x3)

    # Tiny FC + broadcast multiply in plain XLA (per review: no MXU benefit in-kernel,
    # and XLA's broadcast multiply is HBM-roofline and fuses with surrounding ops).
    avg = stats[..., 0]          # (b, c)
    mx = stats[..., 1]           # (b, c)

    def fc(v):
        hh = _gelu_exact(v @ w1 + b1.reshape(-1))
        return jax.nn.sigmoid(hh @ w2 + b2.reshape(-1))

    gate = fc(avg) + fc(mx)                                   # (b, c)
    out3 = (x3.astype(jnp.float32) * gate[:, :, None]).astype(x.dtype)
    return out3.reshape(b, c, d, h, w)


def reference_forward(x, w1, b1, w2, b2):
    """Pure-JAX reference matching the PyTorch module semantics."""
    avg = jnp.mean(x, axis=(2, 3, 4))  # (b, c)
    mx = jnp.max(x, axis=(2, 3, 4))    # (b, c)

    def fc(v):
        h = v @ w1 + b1[0]
        h = _gelu_exact(h)
        return jax.nn.sigmoid(h @ w2 + b2[0])

    gate = fc(avg) + fc(mx)            # (b, c)
    return gate[:, :, None, None, None] * x


if __name__ == "__main__":
    # Module config: channel=32, reduction=4 -> hidden=8; S = 4*8*16 = 512.
    B, C, D, H, W = 2, 32, 4, 8, 16
    RED = 4
    CH = C // RED

    key = jax.random.PRNGKey(0)
    kx, k1, k2, k3, k4 = jax.random.split(key, 5)

    x = jax.random.normal(kx, (B, C, D, H, W), dtype=jnp.float32)

    # Deterministic Linear init (PyTorch-style uniform(-1/sqrt(fan_in), 1/sqrt(fan_in))).
    lim1 = 1.0 / math.sqrt(C)
    lim2 = 1.0 / math.sqrt(CH)
    w1 = jax.random.uniform(k1, (C, CH), jnp.float32, -lim1, lim1)
    b1 = jax.random.uniform(k2, (1, CH), jnp.float32, -lim1, lim1)
    w2 = jax.random.uniform(k3, (CH, C), jnp.float32, -lim2, lim2)
    b2 = jax.random.uniform(k4, (1, C), jnp.float32, -lim2, lim2)

    ref = jax.block_until_ready(reference_forward(x, w1, b1, w2, b2))

    # Default path: fused single-pass kernel (slab fits easily in VMEM).
    out_fused = jax.block_until_ready(channel_attention_3d(x, w1, b1, w2, b2))
    np.testing.assert_allclose(np.asarray(out_fused), np.asarray(ref),
                               rtol=1e-5, atol=1e-5)

    # Force the large-S streaming fallback to exercise the multi-tile reduce with
    # (C,128) accumulators (s_tile=256 -> 2 S-tiles x 2 chunks).
    out_stream = jax.block_until_ready(
        channel_attention_3d(x, w1, b1, w2, b2, force_path="stream", s_tile=256))
    np.testing.assert_allclose(np.asarray(out_stream), np.asarray(ref),
                               rtol=1e-5, atol=1e-5)

    print("KERNEL_OK")
</pallas_src>

<mosaic_0001>
module attributes {stable_mosaic.version = 11 : i64} {
  func.func @_fused_kernel(%arg0: i32, %arg1: memref<1x32x512xf32, #tpu.memory_space<vmem>>, %arg2: memref<8x32xf32, #tpu.memory_space<vmem>>, %arg3: memref<8x1xf32, #tpu.memory_space<vmem>>, %arg4: memref<32x8xf32, #tpu.memory_space<vmem>>, %arg5: memref<32x1xf32, #tpu.memory_space<vmem>>, %arg6: memref<1x32x512xf32, #tpu.memory_space<vmem>>) attributes {dimension_semantics = [#tpu.dimension_semantics<parallel>], iteration_bounds = array<i64: 2>, scalar_prefetch = 0 : i64, scratch_operands = 0 : i64, tpu.core_type = #tpu.core_type<tc>, window_params = [{transform_indices = @transform_0, window_bounds = array<i64: 1, 32, 512>}, {pipeline_mode = #tpu.pipeline_mode<synchronous>, transform_indices = @transform_1, window_bounds = array<i64: 8, 32>}, {pipeline_mode = #tpu.pipeline_mode<synchronous>, transform_indices = @transform_2, window_bounds = array<i64: 8, 1>}, {pipeline_mode = #tpu.pipeline_mode<synchronous>, transform_indices = @transform_3, window_bounds = array<i64: 32, 8>}, {pipeline_mode = #tpu.pipeline_mode<synchronous>, transform_indices = @transform_4, window_bounds = array<i64: 32, 1>}, {transform_indices = @transform_5, window_bounds = array<i64: 1, 32, 512>}]} {
    %c0 = arith.constant 0 : index
    %c0_0 = arith.constant 0 : index
    %c0_1 = arith.constant 0 : index
    %0 = vector.load %arg1[%c0, %c0_0, %c0_1] : memref<1x32x512xf32, #tpu.memory_space<vmem>>, vector<1x32x512xf32>
    %1 = vector.shape_cast %0 : vector<1x32x512xf32> to vector<32x512xf32>
    %cst = arith.constant dense<0.000000e+00> : vector<32xf32>
    %2 = vector.multi_reduction <add>, %1, %cst [1] : vector<32x512xf32> to vector<32xf32>
    %3 = vector.shape_cast %2 : vector<32xf32> to vector<32x1xf32>
    %cst_2 = arith.constant 0.001953125 : f32
    %4 = vector.broadcast %cst_2 : f32 to vector<32x1xf32>
    %5 = arith.mulf %3, %4 : vector<32x1xf32>
    %cst_3 = arith.constant dense<0xFF800000> : vector<32xf32>
    %6 = vector.multi_reduction <maximumf>, %1, %cst_3 [1] : vector<32x512xf32> to vector<32xf32>
    %7 = vector.shape_cast %6 : vector<32xf32> to vector<32x1xf32>
    %8 = tpu.iota {dimensions = array<i32: 1>} : vector<32x2xi32>
    %c0_i32 = arith.constant 0 : i32
    %9 = vector.broadcast %c0_i32 : i32 to vector<32x2xi32>
    %10 = arith.cmpi eq, %8, %9 : vector<32x2xi32>
    %11 = vector.shape_cast %5 : vector<32x1xf32> to vector<32x1xf32>
    %12 = vector.broadcast %11 : vector<32x1xf32> to vector<32x2xf32>
    %13 = vector.shape_cast %7 : vector<32x1xf32> to vector<32x1xf32>
    %14 = vector.broadcast %13 : vector<32x1xf32> to vector<32x2xf32>
    %15 = arith.select %10, %12, %14 : vector<32x2xi1>, vector<32x2xf32>
    %c0_4 = arith.constant 0 : index
    %c0_5 = arith.constant 0 : index
    %16 = vector.load %arg2[%c0_4, %c0_5] : memref<8x32xf32, #tpu.memory_space<vmem>>, vector<8x32xf32>
    %cst_6 = arith.constant dense<0.000000e+00> : vector<8x2xf32>
    %17 = tpu.matmul %16, %15, %cst_6 {dimension_numbers = #tpu.dot_dimension_numbers<[1], [0], [0], [1], [0, 0, 1, 1], [], []>} : vector<8x32xf32>, vector<32x2xf32>, vector<8x2xf32> -> vector<8x2xf32>
    %c0_7 = arith.constant 0 : index
    %c0_8 = arith.constant 0 : index
    %18 = vector.load %arg3[%c0_7, %c0_8] : memref<8x1xf32, #tpu.memory_space<vmem>>, vector<8x1xf32>
    %19 = vector.broadcast %18 : vector<8x1xf32> to vector<8x2xf32>
    %20 = arith.addf %17, %19 : vector<8x2xf32>
    %cst_9 = arith.constant 5.000000e-01 : f32
    %21 = vector.broadcast %cst_9 : f32 to vector<8x2xf32>
    %22 = arith.mulf %21, %20 : vector<8x2xf32>
    %cst_10 = arith.constant 0.707106769 : f32
    %23 = vector.broadcast %cst_10 : f32 to vector<8x2xf32>
    %24 = arith.mulf %20, %23 : vector<8x2xf32>
    %25 = math.erf %24 : vector<8x2xf32>
    %cst_11 = arith.constant 1.000000e+00 : f32
    %26 = vector.broadcast %cst_11 : f32 to vector<8x2xf32>
    %27 = arith.addf %26, %25 : vector<8x2xf32>
    %28 = arith.mulf %22, %27 : vector<8x2xf32>
    %c0_12 = arith.constant 0 : index
    %c0_13 = arith.constant 0 : index
    %29 = vector.load %arg4[%c0_12, %c0_13] : memref<32x8xf32, #tpu.memory_space<vmem>>, vector<32x8xf32>
    %cst_14 = arith.constant dense<0.000000e+00> : vector<32x2xf32>
    %30 = tpu.matmul %29, %28, %cst_14 {dimension_numbers = #tpu.dot_dimension_numbers<[1], [0], [0], [1], [0, 0, 1, 1], [], []>} : vector<32x8xf32>, vector<8x2xf32>, vector<32x2xf32> -> vector<32x2xf32>
    %c0_15 = arith.constant 0 : index
    %c0_16 = arith.constant 0 : index
    %31 = vector.load %arg5[%c0_15, %c0_16] : memref<32x1xf32, #tpu.memory_space<vmem>>, vector<32x1xf32>
    %32 = vector.broadcast %31 : vector<32x1xf32> to vector<32x2xf32>
    %33 = arith.addf %30, %32 : vector<32x2xf32>
    %34 = arith.negf %33 : vector<32x2xf32>
    %35 = math.exp %34 : vector<32x2xf32>
    %cst_17 = arith.constant 1.000000e+00 : f32
    %36 = vector.broadcast %cst_17 : f32 to vector<32x2xf32>
    %37 = arith.addf %36, %35 : vector<32x2xf32>
    %38 = arith.divf %36, %37 : vector<32x2xf32>
    %cst_18 = arith.constant dense<0.000000e+00> : vector<32xf32>
    %39 = vector.multi_reduction <add>, %38, %cst_18 [1] : vector<32x2xf32> to vector<32xf32>
    %40 = vector.shape_cast %39 : vector<32xf32> to vector<32x1xf32>
    %41 = vector.broadcast %40 : vector<32x1xf32> to vector<32x512xf32>
    %42 = arith.mulf %1, %41 : vector<32x512xf32>
    %c0_19 = arith.constant 0 : index
    %c0_20 = arith.constant 0 : index
    %c0_21 = arith.constant 0 : index
    %43 = vector.load %arg6[%c0_19, %c0_20, %c0_21] : memref<1x32x512xf32, #tpu.memory_space<vmem>>, vector<1x32x512xf32>
    %44 = vector.shape_cast %43 : vector<1x32x512xf32> to vector<32x512xf32>
    %45 = vector.shape_cast %42 : vector<32x512xf32> to vector<1x32x512xf32>
    tpu.vector_store %arg6[%c0_19, %c0_20, %c0_21], %45 {strides = array<i32>} : memref<1x32x512xf32, #tpu.memory_space<vmem>>, vector<1x32x512xf32>,
    return
  }
  func.func @transform_0(%arg0: i32) -> (i32, i32, i32) {
    %c0_i32 = arith.constant 0 : i32
    %c0_i32_0 = arith.constant 0 : i32
    %c0_i32_1 = arith.constant 0 : i32
    return %arg0, %c0_i32, %c0_i32_0 : i32, i32, i32
  }
  func.func @transform_1(%arg0: i32) -> (i32, i32) {
    %c0_i32 = arith.constant 0 : i32
    %c0_i32_0 = arith.constant 0 : i32
    %c0_i32_1 = arith.constant 0 : i32
    return %c0_i32, %c0_i32_0 : i32, i32
  }
  func.func @transform_2(%arg0: i32) -> (i32, i32) {
    %c0_i32 = arith.constant 0 : i32
    %c0_i32_0 = arith.constant 0 : i32
    %c0_i32_1 = arith.constant 0 : i32
    return %c0_i32, %c0_i32_0 : i32, i32
  }
  func.func @transform_3(%arg0: i32) -> (i32, i32) {
    %c0_i32 = arith.constant 0 : i32
    %c0_i32_0 = arith.constant 0 : i32
    %c0_i32_1 = arith.constant 0 : i32
    return %c0_i32, %c0_i32_0 : i32, i32
  }
  func.func @transform_4(%arg0: i32) -> (i32, i32) {
    %c0_i32 = arith.constant 0 : i32
    %c0_i32_0 = arith.constant 0 : i32
    %c0_i32_1 = arith.constant 0 : i32
    return %c0_i32, %c0_i32_0 : i32, i32
  }
  func.func @transform_5(%arg0: i32) -> (i32, i32, i32) {
    %c0_i32 = arith.constant 0 : i32
    %c0_i32_0 = arith.constant 0 : i32
    %c0_i32_1 = arith.constant 0 : i32
    return %arg0, %c0_i32, %c0_i32_0 : i32, i32, i32
  }
}

</mosaic_0001>

<llo_original>
// kernel: tpu_custom_call.1
$region0: #{tpu_custom_call.1}
  #allocation0 [shape = 'u32[]', space=smem, size = 0x4, offset = 0x4, fixed_abs, tag = 'smem constant byte address 0x4 - core index']
  #allocation1 [shape = 'u32[144,128]{1,0:T(1,128)}', space=vmem, size = 0x12000, scoped, tag = 'internal scratch']
  %s0 = inlined_call_operand.hbm [shape: f32[2,32,512], index: 0, kind: input, shape index: {}]
  %s1 = inlined_call_operand.vmem [shape: f32[8,32], index: 1, kind: input, shape index: {}]
  %s2 = inlined_call_operand.vmem [shape: f32[8,1], index: 2, kind: input, shape index: {}]
  %s3 = inlined_call_operand.vmem [shape: f32[32,8], index: 3, kind: input, shape index: {}]
  %s4 = inlined_call_operand.vmem [shape: f32[32,1], index: 4, kind: input, shape index: {}]
  %s5 = inlined_call_operand.hbm [shape: f32[2,32,512], index: 5, kind: output, shape index: {}]
  %s6 = sld [smem:[#allocation0]]
  $region57: #{tpu_custom_call.1} parent=0
    _
  %s8 = ssub.s32 1, %s6
  %s9 = scalar_select 0, %s8, %s6
  $region1: #{tpu_custom_call.1} parent=0
    #allocation2 [shape = 'u8[131072]{0}', space=vmem, size = 0x20000, scoped, tag = 'input window, operand 0']
    #allocation3 [shape = 's32[2]{0}', space=sflag, size = 0x8, scoped, tag = 'scoped memory for tpu_custom_call.1']
    #allocation4 [shape = 's32[2]{0}', space=sflag, size = 0x8, scoped, tag = 'scoped memory for tpu_custom_call.1']
    #allocation5 [shape = 'u8[131072]{0}', space=vmem, size = 0x20000, scoped, tag = 'output window, operand 0']
    %10 = vsyncpa [#allocation3], 0
    %s11 = scalar_lea.sflag [#allocation3], 1
    %12 = vsyncpa %s11, 0
    %13 = vsyncpa [#allocation4], 0
    %s14 = scalar_lea.sflag [#allocation4], 1
    %15 = vsyncpa %s14, 0
    loop: start=0, step=1, limit=4
    $region2: #{tpu_custom_call.1} parent=1 // loop_pre_header
      _
    $region3: #{tpu_custom_call.1} parent=1 // loop_header
      %s17 = sphi 0, %s21
      %p18 = scmp.ge.s32.totalorder %s17, 4
      %s27 = sphi 0, %s29
      %s30 = sphi 0, %s27
      %s31 = sphi 0, %s30
      %s47 = sphi 0, %s31
      %s51 = sphi 0, %s51
      %s53 = sphi 0, %s51
      %s54 = sphi 0, %s53
      %s68 = sphi 0, %s54
      %s72 = sphi 0, %s72
      %s74 = sphi 0, %s72
      %s75 = sphi 0, %s74
      %s89 = sphi 0, %s75
      %s93 = sphi 0, %s93
      %s95 = sphi 0, %s93
      %s96 = sphi 0, %s95
      %s110 = sphi 0, %s96
      %s114 = sphi 0, %s114
      %s116 = sphi 0, %s114
      %s117 = sphi 0, %s116
      %s131 = sphi 0, %s117
      %s137 = sphi 0, %s139
      %s140 = sphi 0, %s137
      %s141 = sphi 0, %s140
      %s157 = sphi 0, %s141
    $region4: #{tpu_custom_call.1} parent=1 // loop_header_branch
      %20 = sbr.rel (%p18) target = $region8
    $region5: #{tpu_custom_call.1} parent=1 // loop_body
      %s22 = ssub.s32 %s17, 1
      %s23 = ssub.s32 %s17, 2
      %s24 = sadd.s32 %s17, 1
      %s25 = ssub.s32 %s17, %s24
      %p26 = scmp.eq.s32.totalorder %s25, 0
      %s28 = sadd.s32 %s27, 1
      %s29 = scalar_select %p26, %s27, %s28
      %p32 = pneg %p26
      %p33 = scmp.eq.s32.totalorder %s17, 1
      %p34 = por %p32, %p33
      %p35 = scmp.ne.s32.totalorder %s27, %s30
      %p36 = scmp.eq.s32.totalorder %s17, 0
      %p37 = por %p35, %p36
      %p38 = scmp.ne.s32.totalorder %s27, %s30
      %p39 = scmp.eq.s32.totalorder %s22, 1
      %p40 = por %p38, %p39
      %p41 = scmp.ne.s32.totalorder %s30, %s31
      %p42 = scmp.eq.s32.totalorder %s22, 0
      %p43 = por %p41, %p42
      %p44 = scmp.ne.s32.totalorder %s30, %s31
      %p45 = scmp.eq.s32.totalorder %s23, 1
      %p46 = por %p44, %p45
      %p48 = scmp.ne.s32.totalorder %s31, %s47
      %p49 = scmp.eq.s32.totalorder %s23, 0
      %p50 = por %p48, %p49
      %s52 = sadd.s32 %s51, 1
      %p55 = scmp.eq.s32.totalorder %s17, 1
      %p56 = scmp.ne.s32.totalorder %s51, %s53
      %p57 = scmp.eq.s32.totalorder %s17, 0
      %p58 = por %p56, %p57
      %p59 = scmp.ne.s32.totalorder %s51, %s53
      %p60 = scmp.eq.s32.totalorder %s22, 1
      %p61 = por %p59, %p60
      %p62 = scmp.ne.s32.totalorder %s53, %s54
      %p63 = scmp.eq.s32.totalorder %s22, 0
      %p64 = por %p62, %p63
      %p65 = scmp.ne.s32.totalorder %s53, %s54
      %p66 = scmp.eq.s32.totalorder %s23, 1
      %p67 = por %p65, %p66
      %p69 = scmp.ne.s32.totalorder %s54, %s68
      %p70 = scmp.eq.s32.totalorder %s23, 0
      %p71 = por %p69, %p70
      %s73 = sadd.s32 %s72, 1
      %p76 = scmp.eq.s32.totalorder %s17, 1
      %p77 = scmp.ne.s32.totalorder %s72, %s74
      %p78 = scmp.eq.s32.totalorder %s17, 0
      %p79 = por %p77, %p78
      %p80 = scmp.ne.s32.totalorder %s72, %s74
      %p81 = scmp.eq.s32.totalorder %s22, 1
      %p82 = por %p80, %p81
      %p83 = scmp.ne.s32.totalorder %s74, %s75
      %p84 = scmp.eq.s32.totalorder %s22, 0
      %p85 = por %p83, %p84
      %p86 = scmp.ne.s32.totalorder %s74, %s75
      %p87 = scmp.eq.s32.totalorder %s23, 1
      %p88 = por %p86, %p87
      %p90 = scmp.ne.s32.totalorder %s75, %s89
      %p91 = scmp.eq.s32.totalorder %s23, 0
      %p92 = por %p90, %p91
      %s94 = sadd.s32 %s93, 1
      %p97 = scmp.eq.s32.totalorder %s17, 1
      %p98 = scmp.ne.s32.totalorder %s93, %s95
      %p99 = scmp.eq.s32.totalorder %s17, 0
      %p100 = por %p98, %p99
      %p101 = scmp.ne.s32.totalorder %s93, %s95
      %p102 = scmp.eq.s32.totalorder %s22, 1
      %p103 = por %p101, %p102
      %p104 = scmp.ne.s32.totalorder %s95, %s96
      %p105 = scmp.eq.s32.totalorder %s22, 0
      %p106 = por %p104, %p105
      %p107 = scmp.ne.s32.totalorder %s95, %s96
      %p108 = scmp.eq.s32.totalorder %s23, 1
      %p109 = por %p107, %p108
      %p111 = scmp.ne.s32.totalorder %s96, %s110
      %p112 = scmp.eq.s32.totalorder %s23, 0
      %p113 = por %p111, %p112
      %s115 = sadd.s32 %s114, 1
      %p118 = scmp.eq.s32.totalorder %s17, 1
      %p119 = scmp.ne.s32.totalorder %s114, %s116
      %p120 = scmp.eq.s32.totalorder %s17, 0
      %p121 = por %p119, %p120
      %p122 = scmp.ne.s32.totalorder %s114, %s116
      %p123 = scmp.eq.s32.totalorder %s22, 1
      %p124 = por %p122, %p123
      %p125 = scmp.ne.s32.totalorder %s116, %s117
      %p126 = scmp.eq.s32.totalorder %s22, 0
      %p127 = por %p125, %p126
      %p128 = scmp.ne.s32.totalorder %s116, %s117
      %p129 = scmp.eq.s32.totalorder %s23, 1
      %p130 = por %p128, %p129
      %p132 = scmp.ne.s32.totalorder %s117, %s131
      %p133 = scmp.eq.s32.totalorder %s23, 0
      %p134 = por %p132, %p133
      %s135 = ssub.s32 %s17, %s24
      %p136 = scmp.eq.s32.totalorder %s135, 0
      %s138 = sadd.s32 %s137, 1
      %s139 = scalar_select %p136, %s137, %s138
      %p142 = pneg %p136
      %p143 = scmp.eq.s32.totalorder %s17, 1
      %p144 = por %p142, %p143
      %p145 = scmp.ne.s32.totalorder %s137, %s140
      %p146 = scmp.eq.s32.totalorder %s17, 0
      %p147 = por %p145, %p146
      %p148 = scmp.ne.s32.totalorder %s137, %s140
      %p149 = scmp.eq.s32.totalorder %s22, 1
      %p150 = por %p148, %p149
      %p151 = scmp.ne.s32.totalorder %s140, %s141
      %p152 = scmp.eq.s32.totalorder %s22, 0
      %p153 = por %p151, %p152
      %p154 = scmp.ne.s32.totalorder %s140, %s141
      %p155 = scmp.eq.s32.totalorder %s23, 1
      %p156 = por %p154, %p155
      %p158 = scmp.ne.s32.totalorder %s141, %s157
      %p159 = scmp.eq.s32.totalorder %s23, 0
      %p160 = por %p158, %p159
      %p161 = scmp.le.s32.totalorder 1, %s17
      %p162 = scmp.lt.s32.totalorder %s17, 3
      %p163 = pnand %p161, %p162
      %p164 = pneg %p163
      // Predicated region
      $region9: #{tpu_custom_call.1} parent=5 // pred_check
        _
      $region10: #{tpu_custom_call.1} parent=5 // pred_check_branch
        %166 = sbr.rel (%p163) target = $region12
      $region11: #{tpu_custom_call.1} parent=5 // pred_region
        %s167 = ssub.s32 %s17, 1
        // Predicated region
        $region13: #{tpu_custom_call.1} parent=11 // pred_check
          %p168 = pneg %p64
        $region14: #{tpu_custom_call.1} parent=11 // pred_check_branch
          %170 = sbr.rel (%p168) target = $region16
        $region15: #{tpu_custom_call.1} parent=11 // pred_region
          _
        $region16: #{tpu_custom_call.1} parent=11 // pred_fallthru
          _
        // Predicated region
        $region17: #{tpu_custom_call.1} parent=11 // pred_check
          %p171 = pneg %p85
        $region18: #{tpu_custom_call.1} parent=11 // pred_check_branch
          %173 = sbr.rel (%p171) target = $region20
        $region19: #{tpu_custom_call.1} parent=11 // pred_region
          _
        $region20: #{tpu_custom_call.1} parent=11 // pred_fallthru
          _
        // Predicated region
        $region21: #{tpu_custom_call.1} parent=11 // pred_check
          %p174 = pneg %p106
        $region22: #{tpu_custom_call.1} parent=11 // pred_check_branch
          %176 = sbr.rel (%p174) target = $region24
        $region23: #{tpu_custom_call.1} parent=11 // pred_region
          _
        $region24: #{tpu_custom_call.1} parent=11 // pred_fallthru
          _
        // Predicated region
        $region25: #{tpu_custom_call.1} parent=11 // pred_check
          %p177 = pneg %p127
        $region26: #{tpu_custom_call.1} parent=11 // pred_check_branch
          %179 = sbr.rel (%p177) target = $region28
        $region27: #{tpu_custom_call.1} parent=11 // pred_region
          _
        $region28: #{tpu_custom_call.1} parent=11 // pred_fallthru
          _
      $region12: #{tpu_custom_call.1} parent=5 // pred_fallthru
        _
      %p180 = scmp.lt.s32.totalorder %s17, 2
      // Predicated region
      $region29: #{tpu_custom_call.1} parent=5 // pred_check
        %p181 = pneg %p180
      $region30: #{tpu_custom_call.1} parent=5 // pred_check_branch
        %183 = sbr.rel (%p181) target = $region32
      $region31: #{tpu_custom_call.1} parent=5 // pred_region
        // Predicated region
        $region33: #{tpu_custom_call.1} parent=31 // pred_check
          %p184 = pneg %p37
        $region34: #{tpu_custom_call.1} parent=31 // pred_check_branch
          %186 = sbr.rel (%p184) target = $region36
        $region35: #{tpu_custom_call.1} parent=31 // pred_region
          %s187 = sand.u32 %s27, 1
          %s188 = scalar_lea.sflag [#allocation3], %s187
          %s189 = sand.u32 %s27, 1
          %s190 = smul.addr %s189, 128
          %s191 = scalar_lea.vmem [#allocation2], %s190
          %s193 = ssub.s32 2048, 2048
          %194 = vsyncadd %s188, %s193
          %s195 = smul.addr %s17, 16
          %s196 = smul.addr %s195, 128
          %s197 = scalar_lea.hbm %s0, %s196
          %s198 = sshll.u32 %s191, 4
          %s199 = int_to_ptr.vmem [resolvable:$true] %s198
          %204 = dma.hbm_to_vmem [thread:$0]  %s197, 2048, %s199, %s188, 512, 512, 32
        $region36: #{tpu_custom_call.1} parent=31 // pred_fallthru
          _
      $region32: #{tpu_custom_call.1} parent=5 // pred_fallthru
        _
      %p205 = scmp.le.s32.totalorder 1, %s17
      %p206 = scmp.lt.s32.totalorder %s17, 3
      %p207 = pnand %p205, %p206
      %p208 = pneg %p207
      // Predicated region
      $region37: #{tpu_custom_call.1} parent=5 // pred_check
        _
      $region38: #{tpu_custom_call.1} parent=5 // pred_check_branch
        %210 = sbr.rel (%p207) target = $region40
      $region39: #{tpu_custom_call.1} parent=5 // pred_region
        %s211 = ssub.s32 %s17, 1
        %s212 = sand.u32 %s30, 1
        %s213 = scalar_lea.sflag [#allocation3], %s212
        %s214 = sand.u32 %s30, 1
        %s215 = smul.addr %s214, 128
        %s216 = scalar_lea.vmem [#allocation2], %s215
        // Predicated region
        $region41: #{tpu_custom_call.1} parent=39 // pred_check
          %p217 = pneg %p43
        $region42: #{tpu_custom_call.1} parent=39 // pred_check_branch
          %219 = sbr.rel (%p217) target = $region44
        $region43: #{tpu_custom_call.1} parent=39 // pred_region
          %220 = dma.done %s213, 2048
        $region44: #{tpu_custom_call.1} parent=39 // pred_fallthru
          _
        %s221 = sand.u32 %s30, 1
        %s222 = scalar_lea.sflag [#allocation3], %s221
        %s223 = sand.u32 %s30, 1
        %s224 = smul.addr %s223, 128
        %s225 = scalar_lea.vmem [#allocation2], %s224
        %p226 = pneg %p43
        %p227 = pneg %p40
        %p228 = pneg %p64
        %p229 = pneg %p61
        %p230 = pneg %p85
        %p231 = pneg %p82
        %p232 = pneg %p106
        %p233 = pneg %p103
        %p234 = pneg %p127
        %p235 = pneg %p124
        %p236 = pneg %p153
        %p237 = pneg %p150
        %s238 = sand.u32 %s140, 1
        %s239 = scalar_lea.sflag [#allocation4], %s238
        %s240 = sand.u32 %s140, 1
        %s241 = smul.addr %s240, 128
        %s242 = scalar_lea.vmem [#allocation5], %s241
        %v243 = vld [vmem:[%s216] sm:$0xff]
        %v244 = vld [vmem:[%s216 + $0x8] sm:$0xff]
        %v245 = vld [vmem:[%s216 + $0x10] sm:$0xff]
        %v246 = vld [vmem:[%s216 + $0x18] sm:$0xff]
        %v247 = vld [vmem:[%s216 + $0x20] sm:$0xff]
        %v248 = vld [vmem:[%s216 + $0x28] sm:$0xff]
        %v249 = vld [vmem:[%s216 + $0x30] sm:$0xff]
        %v250 = vld [vmem:[%s216 + $0x38] sm:$0xff]
        %v251 = vld [vmem:[%s216 + $0x40] sm:$0xff]
        %v252 = vld [vmem:[%s216 + $0x48] sm:$0xff]
        %v253 = vld [vmem:[%s216 + $0x50] sm:$0xff]
        %v254 = vld [vmem:[%s216 + $0x58] sm:$0xff]
        %v255 = vld [vmem:[%s216 + $0x60] sm:$0xff]
        %v256 = vld [vmem:[%s216 + $0x68] sm:$0xff]
        %v257 = vld [vmem:[%s216 + $0x70] sm:$0xff]
        %v258 = vld [vmem:[%s216 + $0x78] sm:$0xff]
        %v259 = vadd.f32 %v243, %v244
        %v260 = vadd.f32 %v259, %v245
        %v261 = vadd.f32 %v260, %v246
        %262 = vadd.xlane.f32.xlu0 %v261
        %v263 = vpop.xlane.xlu0 %262
        %v264 = vadd.f32 %v247, %v248
        %v265 = vadd.f32 %v264, %v249
        %v266 = vadd.f32 %v265, %v250
        %267 = vadd.xlane.f32.xlu0 %v266
        %v268 = vpop.xlane.xlu0 %267
        %v269 = vadd.f32 %v251, %v252
        %v270 = vadd.f32 %v269, %v253
        %v271 = vadd.f32 %v270, %v254
        %272 = vadd.xlane.f32.xlu0 %v271
        %v273 = vpop.xlane.xlu0 %272
        %v274 = vadd.f32 %v255, %v256
        %v275 = vadd.f32 %v274, %v257
        %v276 = vadd.f32 %v275, %v258
        %277 = vadd.xlane.f32.xlu0 %v276
        %v278 = vpop.xlane.xlu0 %277
        %v279 = vmul.f32 %v263, 0.001953125
        %v280 = vmul.f32 %v268, 0.001953125
        %v281 = vmul.f32 %v273, 0.001953125
        %v282 = vmul.f32 %v278, 0.001953125
        %v283 = vmax.f32 %v243, %v244
        %v284 = vmax.f32 %v283, %v245
        %v285 = vmax.f32 %v284, %v246
        %286 = vmax.xlane.f32.xlu0 %v285
        %v287 = vpop.xlane.xlu0 %286
        %v288 = vmax.f32 %v247, %v248
        %v289 = vmax.f32 %v288, %v249
        %v290 = vmax.f32 %v289, %v250
        %291 = vmax.xlane.f32.xlu0 %v290
        %v292 = vpop.xlane.xlu0 %291
        %v293 = vmax.f32 %v251, %v252
        %v294 = vmax.f32 %v293, %v253
        %v295 = vmax.f32 %v294, %v254
        %296 = vmax.xlane.f32.xlu0 %v295
        %v297 = vpop.xlane.xlu0 %296
        %v298 = vmax.f32 %v255, %v256
        %v299 = vmax.f32 %v298, %v257
        %v300 = vmax.f32 %v299, %v258
        %301 = vmax.xlane.f32.xlu0 %v300
        %v302 = vpop.xlane.xlu0 %301
        %v303 = vlaneseq
        %v304 = vand.u32 %v303, 127
        %vm305 = vcmp.eq.s32.totalorder %v304, 0
        %v306 = vsel %vm305, %v279, %v287
        %v307 = vsel %vm305, %v280, %v292
        %v308 = vsel %vm305, %v281, %v297
        %v309 = vsel %vm305, %v282, %v302
        %v310 = vld [vmem:[%s1] sm:$0xff]
        %v311 = vld [vmem:[%s2] sm:$0xff]
        %313 = vset.pattern.permute.xlu0 0
        %314 = vperm.xlu0 %313, %v311
        %v315 = vpop.permute.xlu0 %314
        %vm317 = vcmask 261120
        %v319 = vsel %vm317, %v310, 0
        %321 = vmatprep.subr.mxu0 0.0
        %322 = vmatpush1.msra.mxu0 %v306
        %323 = vmatprep.subr.mxu0 0.0
        %324 = vmatpush1.msra.mxu0 %v307
        %325 = vmatprep.subr.mxu0 0.0
        %326 = vmatpush1.msra.mxu0 %v308
        %327 = vmatprep.subr.mxu0 0.0
        %328 = vmatpush1.msra.mxu0 %v309
        %329 = vmatprep.subr.mxu0 0.0
        %330 = vmatpush1.msra.mxu0 0.0
        %331 = vmatprep.subr.mxu0 0.0
        %332 = vmatpush1.msra.mxu0 0.0
        %333 = vmatprep.subr.mxu0 0.0
        %334 = vmatpush1.msra.mxu0 0.0
        %335 = vmatprep.subr.mxu0 0.0
        %336 = vmatpush1.msra.mxu0 0.0
        %337 = vmatprep.subr.mxu0 0.0
        %338 = vmatpush1.msra.mxu0 0.0
        %339 = vmatprep.subr.mxu0 0.0
        %340 = vmatpush1.msra.mxu0 0.0
        %341 = vmatprep.subr.mxu0 0.0
        %342 = vmatpush1.msra.mxu0 0.0
        %343 = vmatprep.subr.mxu0 0.0
        %344 = vmatpush1.msra.mxu0 0.0
        %345 = vmatprep.subr.mxu0 0.0
        %346 = vmatpush1.msra.mxu0 0.0
        %347 = vmatprep.subr.mxu0 0.0
        %348 = vmatpush1.msra.mxu0 0.0
        %349 = vmatprep.subr.mxu0 0.0
        %350 = vmatpush1.msra.mxu0 0.0
        %351 = vmatprep.subr.mxu0 0.0
        %352 = vmatpush1.msra.mxu0 0.0
        %353 = vmatprep.subr.mxu0 0.0
        %354 = vmatpush1.msra.mxu0 0.0
        %355 = vmatprep.subr.mxu0 0.0
        %356 = vmatpush1.msra.mxu0 0.0
        %357 = vmatprep.subr.mxu0 0.0
        %358 = vmatpush1.msra.mxu0 0.0
        %359 = vmatprep.subr.mxu0 0.0
        %360 = vmatpush1.msra.mxu0 0.0
        %361 = vmatprep.subr.mxu0 0.0
        %362 = vmatpush1.msra.mxu0 0.0
        %363 = vmatprep.subr.mxu0 0.0
        %364 = vmatpush1.msra.mxu0 0.0
        %365 = vmatprep.subr.mxu0 0.0
        %366 = vmatpush1.msra.mxu0 0.0
        %367 = vmatprep.subr.mxu0 0.0
        %368 = vmatpush1.msra.mxu0 0.0
        %369 = vmatprep.subr.mxu0 0.0
        %370 = vmatpush1.msra.mxu0 0.0
        %371 = vmatprep.subr.mxu0 0.0
        %372 = vmatpush1.msra.mxu0 0.0
        %373 = vmatprep.subr.mxu0 0.0
        %374 = vmatpush1.msra.mxu0 0.0
        %375 = vmatprep.subr.mxu0 0.0
        %376 = vmatpush1.msra.mxu0 0.0
        %377 = vmatprep.subr.mxu0 0.0
        %378 = vmatpush1.msra.mxu0 0.0
        %379 = vmatprep.subr.mxu0 0.0
        %380 = vmatpush1.msra.mxu0 0.0
        %381 = vmatprep.subr.mxu0 0.0
        %382 = vmatpush1.msra.mxu0 0.0
        %383 = vmatprep.subr.mxu0 0.0
        %384 = vmatpush1.msra.mxu0 0.0
        %385 = vmatprep.mubr.f32.mxu0 0.0
        %386 = vmatmul.mubr.f32.gmra.mrb[0].mxu0 %v319
        %v387 = vpop.f32.mrb[0].mxu0
        %v388 = vadd.f32 %v315, %v387
        %v389 = vpop.f32.mrb[0].mxu0
        %390 = vdwg.mxu0
        %v391 = vmul.f32 %v388, 0.5
        %v392 = vmul.f32 %v388, 0.70710677
        %v393 = verf.f32.pop %v392
        %v394 = vadd.f32 %v393, 1.0
        %v395 = vmul.f32 %v391, %v394
        %v396 = vld [vmem:[%s3] sm:$0xff]
        %v397 = vld [vmem:[%s3 + $0x8] sm:$0xff]
        %v398 = vld [vmem:[%s3 + $0x10] sm:$0xff]
        %v399 = vld [vmem:[%s3 + $0x18] sm:$0xff]
        %v400 = vld [vmem:[%s4] sm:$0xff]
        %v401 = vld [vmem:[%s4 + $0x8] sm:$0xff]
        %v402 = vld [vmem:[%s4 + $0x10] sm:$0xff]
        %v403 = vld [vmem:[%s4 + $0x18] sm:$0xff]
        %405 = vset.pattern.permute.xlu0 0
        %406 = vperm.xlu0 %405, %v400
        %v407 = vpop.permute.xlu0 %406
        %410 = vset.pattern.permute.xlu0 0
        %411 = vperm.xlu0 %410, %v401
        %v412 = vpop.permute.xlu0 %411
        %415 = vset.pattern.permute.xlu0 0
        %416 = vperm.xlu0 %415, %v402
        %v417 = vpop.permute.xlu0 %416
        %420 = vset.pattern.permute.xlu0 0
        %421 = vperm.xlu0 %420, %v403
        %v422 = vpop.permute.xlu0 %421
        %vm424 = vcmask 64512
        %v426 = vsel %vm424, %v396, 0
        %v429 = vsel %vm424, %v397, 0
        %v432 = vsel %vm424, %v398, 0
        %v435 = vsel %vm424, %v399, 0
        %437 = vmatprep.subr.mxu0 0.0
        %438 = vmatpush1.msra.mxu0 %v395
        %439 = vmatprep.subr.mxu0 0.0
        %440 = vmatpush1.msra.mxu0 0.0
        %441 = vmatprep.subr.mxu0 0.0
        %442 = vmatpush1.msra.mxu0 0.0
        %443 = vmatprep.subr.mxu0 0.0
        %444 = vmatpush1.msra.mxu0 0.0
        %445 = vmatprep.subr.mxu0 0.0
        %446 = vmatpush1.msra.mxu0 0.0
        %447 = vmatprep.subr.mxu0 0.0
        %448 = vmatpush1.msra.mxu0 0.0
        %449 = vmatprep.subr.mxu0 0.0
        %450 = vmatpush1.msra.mxu0 0.0
        %451 = vmatprep.subr.mxu0 0.0
        %452 = vmatpush1.msra.mxu0 0.0
        %453 = vmatprep.subr.mxu0 0.0
        %454 = vmatpush1.msra.mxu0 0.0
        %455 = vmatprep.subr.mxu0 0.0
        %456 = vmatpush1.msra.mxu0 0.0
        %457 = vmatprep.subr.mxu0 0.0
        %458 = vmatpush1.msra.mxu0 0.0
        %459 = vmatprep.subr.mxu0 0.0
        %460 = vmatpush1.msra.mxu0 0.0
        %461 = vmatprep.subr.mxu0 0.0
        %462 = vmatpush1.msra.mxu0 0.0
        %463 = vmatprep.subr.mxu0 0.0
        %464 = vmatpush1.msra.mxu0 0.0
        %465 = vmatprep.subr.mxu0 0.0
        %466 = vmatpush1.msra.mxu0 0.0
        %467 = vmatprep.subr.mxu0 0.0
        %468 = vmatpush1.msra.mxu0 0.0
        %469 = vmatprep.subr.mxu0 0.0
        %470 = vmatpush1.msra.mxu0 0.0
        %471 = vmatprep.subr.mxu0 0.0
        %472 = vmatpush1.msra.mxu0 0.0
        %473 = vmatprep.subr.mxu0 0.0
        %474 = vmatpush1.msra.mxu0 0.0
        %475 = vmatprep.subr.mxu0 0.0
        %476 = vmatpush1.msra.mxu0 0.0
        %477 = vmatprep.subr.mxu0 0.0
        %478 = vmatpush1.msra.mxu0 0.0
        %479 = vmatprep.subr.mxu0 0.0
        %480 = vmatpush1.msra.mxu0 0.0
        %481 = vmatprep.subr.mxu0 0.0
        %482 = vmatpush1.msra.mxu0 0.0
        %483 = vmatprep.subr.mxu0 0.0
        %484 = vmatpush1.msra.mxu0 0.0
        %485 = vmatprep.subr.mxu0 0.0
        %486 = vmatpush1.msra.mxu0 0.0
        %487 = vmatprep.subr.mxu0 0.0
        %488 = vmatpush1.msra.mxu0 0.0
        %489 = vmatprep.subr.mxu0 0.0
        %490 = vmatpush1.msra.mxu0 0.0
        %491 = vmatprep.subr.mxu0 0.0
        %492 = vmatpush1.msra.mxu0 0.0
        %493 = vmatprep.subr.mxu0 0.0
        %494 = vmatpush1.msra.mxu0 0.0
        %495 = vmatprep.subr.mxu0 0.0
        %496 = vmatpush1.msra.mxu0 0.0
        %497 = vmatprep.subr.mxu0 0.0
        %498 = vmatpush1.msra.mxu0 0.0
        %499 = vmatprep.subr.mxu0 0.0
        %500 = vmatpush1.msra.mxu0 0.0
        %501 = vmatprep.mubr.f32.mxu0 0.0
        %502 = vmatmul.mubr.f32.gmra.mrb[0].mxu0 %v426
        %v503 = vpop.f32.mrb[0].mxu0
        %v504 = vadd.f32 %v407, %v503
        %v505 = vpop.f32.mrb[0].mxu0
        %506 = vmatprep.mubr.f32.mxu0 0.0
        %507 = vmatmul.mubr.f32.gmra.mrb[0].mxu0 %v429
        %v508 = vpop.f32.mrb[0].mxu0
        %v509 = vadd.f32 %v412, %v508
        %v510 = vpop.f32.mrb[0].mxu0
        %511 = vmatprep.mubr.f32.mxu0 0.0
        %512 = vmatmul.mubr.f32.gmra.mrb[0].mxu0 %v432
        %v513 = vpop.f32.mrb[0].mxu0
        %v514 = vadd.f32 %v417, %v513
        %v515 = vpop.f32.mrb[0].mxu0
        %516 = vmatprep.mubr.f32.mxu0 0.0
        %517 = vmatmul.mubr.f32.gmra.mrb[0].mxu0 %v435
        %v518 = vpop.f32.mrb[0].mxu0
        %v519 = vadd.f32 %v422, %v518
        %v520 = vpop.f32.mrb[0].mxu0
        %521 = vdwg.mxu0
        %v522 = vxor.u32 %v504, 2147483648
        %v523 = vxor.u32 %v509, 2147483648
        %v524 = vxor.u32 %v514, 2147483648
        %v525 = vxor.u32 %v519, 2147483648
        %v526 = vmul.f32 %v522, 1.442695
        %v527 = vpow.pop %v526
        %v528 = vmul.f32 %v523, 1.442695
        %v529 = vpow.pop %v528
        %v530 = vmul.f32 %v524, 1.442695
        %v531 = vpow.pop %v530
        %v532 = vmul.f32 %v525, 1.442695
        %v533 = vpow.pop %v532
        %v534 = vadd.f32 %v527, 1.0
        %v535 = vadd.f32 %v529, 1.0
        %v536 = vadd.f32 %v531, 1.0
        %v537 = vadd.f32 %v533, 1.0
        %v538 = vrcp.pop %v534
        %v539 = vmul.f32 1.0, %v538
        %v540 = vrcp.pop %v535
        %v541 = vmul.f32 1.0, %v540
        %v542 = vrcp.pop %v536
        %v543 = vmul.f32 1.0, %v542
        %v544 = vrcp.pop %v537
        %v545 = vmul.f32 1.0, %v544
        %vm546 = vcmask 15360
        %v547 = vsel %vm546, %v539, 0.0
        %548 = vadd.xlane.f32.xlu0 %v547
        %v549 = vpop.xlane.xlu0 %548
        %v550 = vsel %vm546, %v541, 0.0
        %551 = vadd.xlane.f32.xlu0 %v550
        %v552 = vpop.xlane.xlu0 %551
        %v553 = vsel %vm546, %v543, 0.0
        %554 = vadd.xlane.f32.xlu0 %v553
        %v555 = vpop.xlane.xlu0 %554
        %v556 = vsel %vm546, %v545, 0.0
        %557 = vadd.xlane.f32.xlu0 %v556
        %v558 = vpop.xlane.xlu0 %557
        %v559 = vmul.f32 %v243, %v549
        %v560 = vmul.f32 %v244, %v549
        %v561 = vmul.f32 %v245, %v549
        %v562 = vmul.f32 %v246, %v549
        %v563 = vmul.f32 %v247, %v552
        %v564 = vmul.f32 %v248, %v552
        %v565 = vmul.f32 %v249, %v552
        %v566 = vmul.f32 %v250, %v552
        %v567 = vmul.f32 %v251, %v555
        %v568 = vmul.f32 %v252, %v555
        %v569 = vmul.f32 %v253, %v555
        %v570 = vmul.f32 %v254, %v555
        %v571 = vmul.f32 %v255, %v558
        %v572 = vmul.f32 %v256, %v558
        %v573 = vmul.f32 %v257, %v558
        %v574 = vmul.f32 %v258, %v558
        %575 = vst [vmem:[%s242] sm:$0xff] %v559
        %576 = vst [vmem:[%s242 + $0x8] sm:$0xff] %v560
        %577 = vst [vmem:[%s242 + $0x10] sm:$0xff] %v561
        %578 = vst [vmem:[%s242 + $0x18] sm:$0xff] %v562
        %579 = vst [vmem:[%s242 + $0x20] sm:$0xff] %v563
        %580 = vst [vmem:[%s242 + $0x28] sm:$0xff] %v564
        %581 = vst [vmem:[%s242 + $0x30] sm:$0xff] %v565
        %582 = vst [vmem:[%s242 + $0x38] sm:$0xff] %v566
        %583 = vst [vmem:[%s242 + $0x40] sm:$0xff] %v567
        %584 = vst [vmem:[%s242 + $0x48] sm:$0xff] %v568
        %585 = vst [vmem:[%s242 + $0x50] sm:$0xff] %v569
        %586 = vst [vmem:[%s242 + $0x58] sm:$0xff] %v570
        %587 = vst [vmem:[%s242 + $0x60] sm:$0xff] %v571
        %588 = vst [vmem:[%s242 + $0x68] sm:$0xff] %v572
        %589 = vst [vmem:[%s242 + $0x70] sm:$0xff] %v573
        %590 = vst [vmem:[%s242 + $0x78] sm:$0xff] %v574
        %s591 = sand.u32 %s140, 1
        %s592 = scalar_lea.sflag [#allocation4], %s591
        %s593 = sand.u32 %s140, 1
        %s594 = smul.addr %s593, 128
        %s595 = scalar_lea.vmem [#allocation5], %s594
        // Predicated region
        $region45: #{tpu_custom_call.1} parent=39 // pred_check
          %p596 = pneg %p150
        $region46: #{tpu_custom_call.1} parent=39 // pred_check_branch
          %598 = sbr.rel (%p596) target = $region48
        $region47: #{tpu_custom_call.1} parent=39 // pred_region
          %s600 = ssub.s32 2048, 2048
          %601 = vsyncadd %s592, %s600
          %s602 = smul.addr %s22, 16
          %s603 = smul.addr %s602, 128
          %s604 = scalar_lea.hbm %s5, %s603
          %s605 = sshll.u32 %s595, 4
          %s606 = int_to_ptr.vmem [resolvable:$true] %s605
          %611 = dma.vmem_to_hbm [thread:$0]  %s606, 2048, %s604, %s592, 512, 512, 32
        $region48: #{tpu_custom_call.1} parent=39 // pred_fallthru
          _
      $region40: #{tpu_custom_call.1} parent=5 // pred_fallthru
        _
      %p612 = scmp.le.s32.totalorder 2, %s17
      // Predicated region
      $region49: #{tpu_custom_call.1} parent=5 // pred_check
        %p613 = pneg %p612
      $region50: #{tpu_custom_call.1} parent=5 // pred_check_branch
        %615 = sbr.rel (%p613) target = $region52
      $region51: #{tpu_custom_call.1} parent=5 // pred_region
        %s616 = ssub.s32 %s17, 2
        // Predicated region
        $region53: #{tpu_custom_call.1} parent=51 // pred_check
          %p617 = pneg %p156
        $region54: #{tpu_custom_call.1} parent=51 // pred_check_branch
          %619 = sbr.rel (%p617) target = $region56
        $region55: #{tpu_custom_call.1} parent=51 // pred_region
          %s620 = sand.u32 %s141, 1
          %s621 = scalar_lea.sflag [#allocation4], %s620
          %s622 = sand.u32 %s141, 1
          %s623 = smul.addr %s622, 128
          %s624 = scalar_lea.vmem [#allocation5], %s623
          %625 = dma.done %s621, 2048
        $region56: #{tpu_custom_call.1} parent=51 // pred_fallthru
          _
      $region52: #{tpu_custom_call.1} parent=5 // pred_fallthru
        _
    $region6: #{tpu_custom_call.1} parent=1 // loop_footer
      %s21 = sadd.s32 1, %s17
    $region7: #{tpu_custom_call.1} parent=1 // loop_footer_branch
      %16 = sbr.rel target = $region3
    $region8: #{tpu_custom_call.1} parent=1 // loop_exit
      _
    %626 = vsyncpa [#allocation3], 1
    %s627 = scalar_lea.sflag [#allocation3], 1
    %628 = vsyncpa %s627, 1
    %629 = vsyncpa [#allocation4], 1
    %s630 = scalar_lea.sflag [#allocation4], 1
    %631 = vsyncpa %s630, 1

</llo_original>
